<compile_context>
chip_gen: v5e
topology: v5e:2x2
jax: 0.10.0
libtpu: 0.0.40
codegen_flags: <defaults>
</compile_context>

<pallas_src>
import functools

import jax
import jax.numpy as jnp
from jax.experimental import pallas as pl
from jax.experimental.pallas import tpu as pltpu

_LANE = 128  # lane width: output feature dims padded to a multiple of this


def _round_up(n, m):
    return ((n + m - 1) // m) * m


# ----------------------- one-time parameter preparation -----------------------

def prepare_mlp_params(params, mxu_dtype=jnp.float32):
    """Pad weights/biases once (hoisted out of the per-call path).

    params: list of (w, b) with w:[in, out] (pre-transposed vs. nn.Linear's
            [out, in]) and b:[1, out], float32.

    Output feature dims are zero-padded to multiples of 128 (lane-dense); each
    layer's input dim matches the previous layer's padded output dim, so the
    first layer keeps the raw input_size and x needs no padding at all.  The
    '-1' of sigmoid(layer(x) - 1) is folded into the hidden biases.  Weights
    are cast to mxu_dtype (f32 default; bf16 is the v6e/v7x MXU lever); biases
    stay f32 so bias-add/sigmoid run in f32 on every TPU generation (v5e has
    no bf16 VPU/EUP).
    """
    num_hidden = len(params) - 1
    in_dims = [params[0][0].shape[0]] + [
        _round_up(w.shape[1], _LANE) for w, _ in params[:-1]]
    padded = []
    for idx, (w, b) in enumerate(params):
        fin, fout = w.shape
        pin, pout = in_dims[idx], _round_up(fout, _LANE)
        w_p = (jnp.zeros((pin, pout), jnp.float32)
               .at[:fin, :fout].set(w.astype(jnp.float32))
               .astype(mxu_dtype))
        b_real = b.reshape(1, fout).astype(jnp.float32)
        if idx < num_hidden:
            b_real = b_real - 1.0        # fold the '-1' shift into the bias
        b_p = jnp.zeros((1, pout), jnp.float32).at[:, :fout].set(b_real)
        # padded hidden lanes produce sigmoid(0)=0.5, but the next layer's
        # padded weight rows are zero, so they contribute nothing.
        padded.append((w_p, b_p))
    return padded


# --------------------------------- the kernel ---------------------------------

def _mlp_fused_kernel(*refs, num_hidden):
    """Fused MLP forward. refs = (x, w0, b0, w1, b1, ..., wL, bL, out).

    Hidden biases already carry the '-1' shift; intermediates stay in vregs."""
    x_ref, o_ref = refs[0], refs[-1]
    wb = refs[1:-1]

    y = x_ref[...].astype(jnp.float32)
    for i in range(num_hidden):
        w = wb[2 * i][...]
        b = wb[2 * i + 1][...]
        z = jnp.dot(y.astype(w.dtype), w,
                    preferred_element_type=jnp.float32) + b
        # sigmoid(z): exp and approx-reciprocal both issue on the EUP slot.
        y = pl.reciprocal(1.0 + jnp.exp(-z), approx=True)
    w = wb[-2][...]
    b = wb[-1][...]
    y = jnp.dot(y.astype(w.dtype), w, preferred_element_type=jnp.float32) + b
    o_ref[...] = y.astype(o_ref.dtype)


# --------------------------------- the wrapper ---------------------------------

def _const_spec(shape, single_buffer):
    """BlockSpec for an operand whose block never changes across the grid."""
    index_map = lambda i: (0, 0)
    if single_buffer and hasattr(pl, "Buffered"):
        try:
            # Constant index_map -> double-buffering is pure VMEM waste.
            return pl.BlockSpec(shape, index_map, pipeline_mode=pl.Buffered(1))
        except TypeError:  # older jax without pipeline_mode support
            pass
    return pl.BlockSpec(shape, index_map)


def mlp_forward(padded_params, x, *, batch_tile=1024):
    """Fused Pallas forward pass (single pallas_call).

    padded_params: output of prepare_mlp_params (padded once at init).
    x: [batch, input_size] float32 — used as-is, no HBM pad-copy.
    Returns the lane-padded output [batch, padded_out]; the caller slices the
    real output columns (keeps the kernel's out_spec lane-dense and avoids an
    extra HBM copy here).
    """
    batch, in_features = x.shape
    assert padded_params[0][0].shape[0] == in_features
    out_pad = padded_params[-1][0].shape[1]
    num_hidden = len(padded_params) - 1
    mxu_dtype = padded_params[0][0].dtype

    # Sublane granularity: 8 rows for f32; bf16 MXU operands want 16-row tiles.
    sublane = 16 if mxu_dtype == jnp.bfloat16 else 8

    # Batch tiling — no padded copy of x; the grid handles the ragged tail.
    tb = min(_round_up(batch_tile, sublane), _round_up(batch, sublane))
    # Keep both v7x TensorCores busy: split into >= 2 'parallel' grid steps
    # whenever the batch is big enough (harmless on 1-TC v5e/v6e).
    if batch >= 2 * sublane and tb >= batch:
        tb = _round_up(pl.cdiv(batch, 2), sublane)
    grid = (pl.cdiv(batch, tb),)

    # Explicit VMEM budget: single-buffered weights + double-buffered I/O tiles
    # + headroom for live intermediates (clamped to v7x's 64 MiB physical VMEM).
    weight_bytes = sum(w.size * w.dtype.itemsize + b.size * b.dtype.itemsize
                       for w, b in padded_params)
    widest = max([out_pad, _round_up(in_features, _LANE)]
                 + [w.shape[1] for w, _ in padded_params])
    act_bytes = 2 * 4 * tb * (_round_up(in_features, _LANE) + out_pad)
    vmem_limit = int(min(64 << 20,
                         max(16 << 20,
                             2 * (weight_bytes + act_bytes
                                  + 4 * tb * widest * (num_hidden + 2)))))

    def build_and_run(single_buffer_weights):
        in_specs = [pl.BlockSpec((tb, in_features), lambda i: (i, 0))]
        flat = [x]
        for w_p, b_p in padded_params:
            in_specs.append(_const_spec(w_p.shape, single_buffer_weights))
            in_specs.append(_const_spec(b_p.shape, single_buffer_weights))
            flat.append(w_p)
            flat.append(b_p)
        kernel = functools.partial(_mlp_fused_kernel, num_hidden=num_hidden)
        return pl.pallas_call(
            kernel,
            out_shape=jax.ShapeDtypeStruct((batch, out_pad), jnp.float32),
            grid=grid,
            in_specs=in_specs,
            out_specs=pl.BlockSpec((tb, out_pad), lambda i: (i, 0)),
            compiler_params=pltpu.CompilerParams(
                dimension_semantics=("parallel",),
                vmem_limit_bytes=vmem_limit),
        )(*flat)

    try:
        return build_and_run(True)
    except Exception:
        # Compatibility fallback if this jax build rejects single-buffered
        # pipeline_mode on constant operands.
        return build_and_run(False)


# ------------------------------------ init ------------------------------------

def init_mlp_params(key, input_size, layer_sizes, output_size,
                    dtype=jnp.float32):
    """Deterministic init mirroring nn.Linear default (U[-1/sqrt(fan_in), ..]).

    Weights are stored pre-transposed as [in, out]; biases as [1, out]."""
    sizes = [input_size] + list(layer_sizes) + [output_size]
    params = []
    for i in range(len(sizes) - 1):
        fan_in, fan_out = sizes[i], sizes[i + 1]
        key, wk, bk = jax.random.split(key, 3)
        bound = 1.0 / jnp.sqrt(jnp.asarray(fan_in, dtype))
        w = jax.random.uniform(wk, (fan_in, fan_out), dtype, -bound, bound)
        b = jax.random.uniform(bk, (1, fan_out), dtype, -bound, bound)
        params.append((w, b))
    return params


if __name__ == "__main__":
    key = jax.random.PRNGKey(0)

    input_size = 16
    layer_sizes = [32, 32]
    output_size = 8
    batch = 8

    pkey, xkey = jax.random.split(key)
    params = init_mlp_params(pkey, input_size, layer_sizes, output_size)
    x = jax.random.normal(xkey, (batch, input_size), jnp.float32)

    # One-time padding / bias fold (hoisted out of the forward path).
    padded_params = prepare_mlp_params(params)

    out_padded = mlp_forward(padded_params, x)
    jax.block_until_ready(out_padded)
    out = out_padded[:, :output_size]   # consumer-side lane slice

    # Pure-JAX reference of the same math (unpadded).
    ref = x
    for w, b in params[:-1]:
        ref = jax.nn.sigmoid(ref @ w + b - 1.0)
    ref = ref @ params[-1][0] + params[-1][1]

    assert out.shape == (batch, output_size)
    # approx-reciprocal sigmoid (EUP vrcp) => slightly looser than f32 eps.
    max_err = float(jnp.max(jnp.abs(out - ref)))
    assert jnp.allclose(out, ref, atol=5e-3, rtol=5e-3), max_err

    print("KERNEL_OK")
</pallas_src>

<mosaic_0001>
module attributes {stable_mosaic.version = 11 : i64} {
  func.func @_mlp_fused_kernel(%arg0: i32, %arg1: memref<8x16xf32, #tpu.memory_space<vmem>>, %arg2: memref<16x128xf32, #tpu.memory_space<vmem>>, %arg3: memref<1x128xf32, #tpu.memory_space<vmem>>, %arg4: memref<128x128xf32, #tpu.memory_space<vmem>>, %arg5: memref<1x128xf32, #tpu.memory_space<vmem>>, %arg6: memref<128x128xf32, #tpu.memory_space<vmem>>, %arg7: memref<1x128xf32, #tpu.memory_space<vmem>>, %arg8: memref<8x128xf32, #tpu.memory_space<vmem>>) attributes {dimension_semantics = [#tpu.dimension_semantics<parallel>], iteration_bounds = array<i64: 1>, scalar_prefetch = 0 : i64, scratch_operands = 0 : i64, tpu.core_type = #tpu.core_type<tc>, window_params = [{transform_indices = @transform_0, window_bounds = array<i64: 8, 16>}, {pipeline_mode = #tpu.pipeline_mode<synchronous>, transform_indices = @transform_1, window_bounds = array<i64: 16, 128>}, {pipeline_mode = #tpu.pipeline_mode<synchronous>, transform_indices = @transform_2, window_bounds = array<i64: 1, 128>}, {pipeline_mode = #tpu.pipeline_mode<synchronous>, transform_indices = @transform_3, window_bounds = array<i64: 128, 128>}, {pipeline_mode = #tpu.pipeline_mode<synchronous>, transform_indices = @transform_4, window_bounds = array<i64: 1, 128>}, {pipeline_mode = #tpu.pipeline_mode<synchronous>, transform_indices = @transform_5, window_bounds = array<i64: 128, 128>}, {pipeline_mode = #tpu.pipeline_mode<synchronous>, transform_indices = @transform_6, window_bounds = array<i64: 1, 128>}, {transform_indices = @transform_7, window_bounds = array<i64: 8, 128>}]} {
    %c0 = arith.constant 0 : index
    %c0_0 = arith.constant 0 : index
    %0 = vector.load %arg1[%c0, %c0_0] : memref<8x16xf32, #tpu.memory_space<vmem>>, vector<8x16xf32>
    %c0_1 = arith.constant 0 : index
    %c0_2 = arith.constant 0 : index
    %1 = vector.load %arg2[%c0_1, %c0_2] : memref<16x128xf32, #tpu.memory_space<vmem>>, vector<16x128xf32>
    %c0_3 = arith.constant 0 : index
    %c0_4 = arith.constant 0 : index
    %2 = vector.load %arg3[%c0_3, %c0_4] : memref<1x128xf32, #tpu.memory_space<vmem>>, vector<1x128xf32>
    %cst = arith.constant dense<0.000000e+00> : vector<8x128xf32>
    %3 = tpu.matmul %0, %1, %cst {dimension_numbers = #tpu.dot_dimension_numbers<[1], [0], [0], [1], [0, 0, 1, 1], [], []>} : vector<8x16xf32>, vector<16x128xf32>, vector<8x128xf32> -> vector<8x128xf32>
    %4 = vector.broadcast %2 : vector<1x128xf32> to vector<8x128xf32>
    %5 = arith.addf %3, %4 : vector<8x128xf32>
    %cst_5 = arith.constant 0.000000e+00 : f32
    %6 = vector.broadcast %cst_5 : f32 to vector<8x128xf32>
    %7 = arith.subf %6, %5 : vector<8x128xf32>
    %8 = math.exp %7 : vector<8x128xf32>
    %cst_6 = arith.constant 1.000000e+00 : f32
    %9 = vector.broadcast %cst_6 : f32 to vector<8x128xf32>
    %10 = arith.addf %9, %8 : vector<8x128xf32>
    %11 = tpu.reciprocal %10 {approx = true} : vector<8x128xf32> -> vector<8x128xf32>
    %c0_7 = arith.constant 0 : index
    %c0_8 = arith.constant 0 : index
    %12 = vector.load %arg4[%c0_7, %c0_8] : memref<128x128xf32, #tpu.memory_space<vmem>>, vector<128x128xf32>
    %c0_9 = arith.constant 0 : index
    %c0_10 = arith.constant 0 : index
    %13 = vector.load %arg5[%c0_9, %c0_10] : memref<1x128xf32, #tpu.memory_space<vmem>>, vector<1x128xf32>
    %cst_11 = arith.constant dense<0.000000e+00> : vector<8x128xf32>
    %14 = tpu.matmul %11, %12, %cst_11 {dimension_numbers = #tpu.dot_dimension_numbers<[1], [0], [0], [1], [0, 0, 1, 1], [], []>} : vector<8x128xf32>, vector<128x128xf32>, vector<8x128xf32> -> vector<8x128xf32>
    %15 = vector.broadcast %13 : vector<1x128xf32> to vector<8x128xf32>
    %16 = arith.addf %14, %15 : vector<8x128xf32>
    %cst_12 = arith.constant 0.000000e+00 : f32
    %17 = vector.broadcast %cst_12 : f32 to vector<8x128xf32>
    %18 = arith.subf %17, %16 : vector<8x128xf32>
    %19 = math.exp %18 : vector<8x128xf32>
    %cst_13 = arith.constant 1.000000e+00 : f32
    %20 = vector.broadcast %cst_13 : f32 to vector<8x128xf32>
    %21 = arith.addf %20, %19 : vector<8x128xf32>
    %22 = tpu.reciprocal %21 {approx = true} : vector<8x128xf32> -> vector<8x128xf32>
    %c0_14 = arith.constant 0 : index
    %c0_15 = arith.constant 0 : index
    %23 = vector.load %arg6[%c0_14, %c0_15] : memref<128x128xf32, #tpu.memory_space<vmem>>, vector<128x128xf32>
    %c0_16 = arith.constant 0 : index
    %c0_17 = arith.constant 0 : index
    %24 = vector.load %arg7[%c0_16, %c0_17] : memref<1x128xf32, #tpu.memory_space<vmem>>, vector<1x128xf32>
    %cst_18 = arith.constant dense<0.000000e+00> : vector<8x128xf32>
    %25 = tpu.matmul %22, %23, %cst_18 {dimension_numbers = #tpu.dot_dimension_numbers<[1], [0], [0], [1], [0, 0, 1, 1], [], []>} : vector<8x128xf32>, vector<128x128xf32>, vector<8x128xf32> -> vector<8x128xf32>
    %26 = vector.broadcast %24 : vector<1x128xf32> to vector<8x128xf32>
    %27 = arith.addf %25, %26 : vector<8x128xf32>
    %c0_19 = arith.constant 0 : index
    %c0_20 = arith.constant 0 : index
    %28 = vector.load %arg8[%c0_19, %c0_20] : memref<8x128xf32, #tpu.memory_space<vmem>>, vector<8x128xf32>
    tpu.vector_store %arg8[%c0_19, %c0_20], %27 {strides = array<i32>} : memref<8x128xf32, #tpu.memory_space<vmem>>, vector<8x128xf32>,
    return
  }
  func.func @transform_0(%arg0: i32) -> (i32, i32) {
    %c0_i32 = arith.constant 0 : i32
    %c0_i32_0 = arith.constant 0 : i32
    return %arg0, %c0_i32 : i32, i32
  }
  func.func @transform_1(%arg0: i32) -> (i32, i32) {
    %c0_i32 = arith.constant 0 : i32
    %c0_i32_0 = arith.constant 0 : i32
    %c0_i32_1 = arith.constant 0 : i32
    return %c0_i32, %c0_i32_0 : i32, i32
  }
  func.func @transform_2(%arg0: i32) -> (i32, i32) {
    %c0_i32 = arith.constant 0 : i32
    %c0_i32_0 = arith.constant 0 : i32
    %c0_i32_1 = arith.constant 0 : i32
    return %c0_i32, %c0_i32_0 : i32, i32
  }
  func.func @transform_3(%arg0: i32) -> (i32, i32) {
    %c0_i32 = arith.constant 0 : i32
    %c0_i32_0 = arith.constant 0 : i32
    %c0_i32_1 = arith.constant 0 : i32
    return %c0_i32, %c0_i32_0 : i32, i32
  }
  func.func @transform_4(%arg0: i32) -> (i32, i32) {
    %c0_i32 = arith.constant 0 : i32
    %c0_i32_0 = arith.constant 0 : i32
    %c0_i32_1 = arith.constant 0 : i32
    return %c0_i32, %c0_i32_0 : i32, i32
  }
  func.func @transform_5(%arg0: i32) -> (i32, i32) {
    %c0_i32 = arith.constant 0 : i32
    %c0_i32_0 = arith.constant 0 : i32
    %c0_i32_1 = arith.constant 0 : i32
    return %c0_i32, %c0_i32_0 : i32, i32
  }
  func.func @transform_6(%arg0: i32) -> (i32, i32) {
    %c0_i32 = arith.constant 0 : i32
    %c0_i32_0 = arith.constant 0 : i32
    %c0_i32_1 = arith.constant 0 : i32
    return %c0_i32, %c0_i32_0 : i32, i32
  }
  func.func @transform_7(%arg0: i32) -> (i32, i32) {
    %c0_i32 = arith.constant 0 : i32
    %c0_i32_0 = arith.constant 0 : i32
    return %arg0, %c0_i32 : i32, i32
  }
}

module attributes {stable_mosaic.version = 11 : i64} {
  func.func @_mlp_fused_kernel(%arg0: i32, %arg1: memref<8x16xf32, #tpu.memory_space<vmem>>, %arg2: memref<16x128xf32, #tpu.memory_space<vmem>>, %arg3: memref<1x128xf32, #tpu.memory_space<vmem>>, %arg4: memref<128x128xf32, #tpu.memory_space<vmem>>, %arg5: memref<1x128xf32, #tpu.memory_space<vmem>>, %arg6: memref<128x128xf32, #tpu.memory_space<vmem>>, %arg7: memref<1x128xf32, #tpu.memory_space<vmem>>, %arg8: memref<8x128xf32, #tpu.memory_space<vmem>>) attributes {dimension_semantics = [#tpu.dimension_semantics<parallel>], iteration_bounds = array<i64: 1>, scalar_prefetch = 0 : i64, scratch_operands = 0 : i64, tpu.core_type = #tpu.core_type<tc>, window_params = [{transform_indices = @transform_0, window_bounds = array<i64: 8, 16>}, {pipeline_mode = #tpu.pipeline_mode<synchronous>, transform_indices = @transform_1, window_bounds = array<i64: 16, 128>}, {pipeline_mode = #tpu.pipeline_mode<synchronous>, transform_indices = @transform_2, window_bounds = array<i64: 1, 128>}, {pipeline_mode = #tpu.pipeline_mode<synchronous>, transform_indices = @transform_3, window_bounds = array<i64: 128, 128>}, {pipeline_mode = #tpu.pipeline_mode<synchronous>, transform_indices = @transform_4, window_bounds = array<i64: 1, 128>}, {pipeline_mode = #tpu.pipeline_mode<synchronous>, transform_indices = @transform_5, window_bounds = array<i64: 128, 128>}, {pipeline_mode = #tpu.pipeline_mode<synchronous>, transform_indices = @transform_6, window_bounds = array<i64: 1, 128>}, {transform_indices = @transform_7, window_bounds = array<i64: 8, 128>}]} {
    %c0 = arith.constant 0 : index
    %c0_0 = arith.constant 0 : index
    %0 = vector.load %arg1[%c0, %c0_0] : memref<8x16xf32, #tpu.memory_space<vmem>>, vector<8x16xf32>
    %c0_1 = arith.constant 0 : index
    %c0_2 = arith.constant 0 : index
    %1 = vector.load %arg2[%c0_1, %c0_2] : memref<16x128xf32, #tpu.memory_space<vmem>>, vector<16x128xf32>
    %c0_3 = arith.constant 0 : index
    %c0_4 = arith.constant 0 : index
    %2 = vector.load %arg3[%c0_3, %c0_4] : memref<1x128xf32, #tpu.memory_space<vmem>>, vector<1x128xf32>
    %cst = arith.constant dense<0.000000e+00> : vector<8x128xf32>
    %3 = tpu.matmul %0, %1, %cst {dimension_numbers = #tpu.dot_dimension_numbers<[1], [0], [0], [1], [0, 0, 1, 1], [], []>} : vector<8x16xf32>, vector<16x128xf32>, vector<8x128xf32> -> vector<8x128xf32>
    %4 = vector.broadcast %2 : vector<1x128xf32> to vector<8x128xf32>
    %5 = arith.addf %3, %4 : vector<8x128xf32>
    %cst_5 = arith.constant 0.000000e+00 : f32
    %6 = vector.broadcast %cst_5 : f32 to vector<8x128xf32>
    %7 = arith.subf %6, %5 : vector<8x128xf32>
    %8 = math.exp %7 : vector<8x128xf32>
    %cst_6 = arith.constant 1.000000e+00 : f32
    %9 = vector.broadcast %cst_6 : f32 to vector<8x128xf32>
    %10 = arith.addf %9, %8 : vector<8x128xf32>
    %11 = tpu.reciprocal %10 {approx = true} : vector<8x128xf32> -> vector<8x128xf32>
    %c0_7 = arith.constant 0 : index
    %c0_8 = arith.constant 0 : index
    %12 = vector.load %arg4[%c0_7, %c0_8] : memref<128x128xf32, #tpu.memory_space<vmem>>, vector<128x128xf32>
    %c0_9 = arith.constant 0 : index
    %c0_10 = arith.constant 0 : index
    %13 = vector.load %arg5[%c0_9, %c0_10] : memref<1x128xf32, #tpu.memory_space<vmem>>, vector<1x128xf32>
    %cst_11 = arith.constant dense<0.000000e+00> : vector<8x128xf32>
    %14 = tpu.matmul %11, %12, %cst_11 {dimension_numbers = #tpu.dot_dimension_numbers<[1], [0], [0], [1], [0, 0, 1, 1], [], []>} : vector<8x128xf32>, vector<128x128xf32>, vector<8x128xf32> -> vector<8x128xf32>
    %15 = vector.broadcast %13 : vector<1x128xf32> to vector<8x128xf32>
    %16 = arith.addf %14, %15 : vector<8x128xf32>
    %cst_12 = arith.constant 0.000000e+00 : f32
    %17 = vector.broadcast %cst_12 : f32 to vector<8x128xf32>
    %18 = arith.subf %17, %16 : vector<8x128xf32>
    %19 = math.exp %18 : vector<8x128xf32>
    %cst_13 = arith.constant 1.000000e+00 : f32
    %20 = vector.broadcast %cst_13 : f32 to vector<8x128xf32>
    %21 = arith.addf %20, %19 : vector<8x128xf32>
    %22 = tpu.reciprocal %21 {approx = true} : vector<8x128xf32> -> vector<8x128xf32>
    %c0_14 = arith.constant 0 : index
    %c0_15 = arith.constant 0 : index
    %23 = vector.load %arg6[%c0_14, %c0_15] : memref<128x128xf32, #tpu.memory_space<vmem>>, vector<128x128xf32>
    %c0_16 = arith.constant 0 : index
    %c0_17 = arith.constant 0 : index
    %24 = vector.load %arg7[%c0_16, %c0_17] : memref<1x128xf32, #tpu.memory_space<vmem>>, vector<1x128xf32>
    %cst_18 = arith.constant dense<0.000000e+00> : vector<8x128xf32>
    %25 = tpu.matmul %22, %23, %cst_18 {dimension_numbers = #tpu.dot_dimension_numbers<[1], [0], [0], [1], [0, 0, 1, 1], [], []>} : vector<8x128xf32>, vector<128x128xf32>, vector<8x128xf32> -> vector<8x128xf32>
    %26 = vector.broadcast %24 : vector<1x128xf32> to vector<8x128xf32>
    %27 = arith.addf %25, %26 : vector<8x128xf32>
    %c0_19 = arith.constant 0 : index
    %c0_20 = arith.constant 0 : index
    %28 = vector.load %arg8[%c0_19, %c0_20] : memref<8x128xf32, #tpu.memory_space<vmem>>, vector<8x128xf32>
    tpu.vector_store %arg8[%c0_19, %c0_20], %27 {strides = array<i32>} : memref<8x128xf32, #tpu.memory_space<vmem>>, vector<8x128xf32>,
    return
  }
  func.func @transform_0(%arg0: i32) -> (i32, i32) {
    %c0_i32 = arith.constant 0 : i32
    %c0_i32_0 = arith.constant 0 : i32
    return %arg0, %c0_i32 : i32, i32
  }
  func.func @transform_1(%arg0: i32) -> (i32, i32) {
    %c0_i32 = arith.constant 0 : i32
    %c0_i32_0 = arith.constant 0 : i32
    %c0_i32_1 = arith.constant 0 : i32
    return %c0_i32, %c0_i32_0 : i32, i32
  }
  func.func @transform_2(%arg0: i32) -> (i32, i32) {
    %c0_i32 = arith.constant 0 : i32
    %c0_i32_0 = arith.constant 0 : i32
    %c0_i32_1 = arith.constant 0 : i32
    return %c0_i32, %c0_i32_0 : i32, i32
  }
  func.func @transform_3(%arg0: i32) -> (i32, i32) {
    %c0_i32 = arith.constant 0 : i32
    %c0_i32_0 = arith.constant 0 : i32
    %c0_i32_1 = arith.constant 0 : i32
    return %c0_i32, %c0_i32_0 : i32, i32
  }
  func.func @transform_4(%arg0: i32) -> (i32, i32) {
    %c0_i32 = arith.constant 0 : i32
    %c0_i32_0 = arith.constant 0 : i32
    %c0_i32_1 = arith.constant 0 : i32
    return %c0_i32, %c0_i32_0 : i32, i32
  }
  func.func @transform_5(%arg0: i32) -> (i32, i32) {
    %c0_i32 = arith.constant 0 : i32
    %c0_i32_0 = arith.constant 0 : i32
    %c0_i32_1 = arith.constant 0 : i32
    return %c0_i32, %c0_i32_0 : i32, i32
  }
  func.func @transform_6(%arg0: i32) -> (i32, i32) {
    %c0_i32 = arith.constant 0 : i32
    %c0_i32_0 = arith.constant 0 : i32
    %c0_i32_1 = arith.constant 0 : i32
    return %c0_i32, %c0_i32_0 : i32, i32
  }
  func.func @transform_7(%arg0: i32) -> (i32, i32) {
    %c0_i32 = arith.constant 0 : i32
    %c0_i32_0 = arith.constant 0 : i32
    return %arg0, %c0_i32 : i32, i32
  }
}

</mosaic_0001>

<llo_original>
// kernel: tpu_custom_call.1
$region0: #{tpu_custom_call.1}
  #allocation0 [shape = 'u32[]', space=smem, size = 0x4, offset = 0x4, fixed_abs, tag = 'smem constant byte address 0x4 - core index']
  #allocation1 [shape = 'u32[72,128]{1,0:T(1,128)}', space=vmem, size = 0x9000, scoped, tag = 'internal scratch']
  %s0 = inlined_call_operand.hbm [shape: f32[8,16], index: 0, kind: input, shape index: {}]
  %s1 = inlined_call_operand.hbm [shape: f32[16,128], index: 1, kind: input, shape index: {}]
  %s2 = inlined_call_operand.vmem [shape: f32[1,128], index: 2, kind: input, shape index: {}]
  %s3 = inlined_call_operand.hbm [shape: f32[128,128], index: 3, kind: input, shape index: {}]
  %s4 = inlined_call_operand.vmem [shape: f32[1,128], index: 4, kind: input, shape index: {}]
  %s5 = inlined_call_operand.hbm [shape: f32[128,128], index: 5, kind: input, shape index: {}]
  %s6 = inlined_call_operand.vmem [shape: f32[1,128], index: 6, kind: input, shape index: {}]
  %s7 = inlined_call_operand.hbm [shape: f32[8,128], index: 7, kind: output, shape index: {}]
  %s8 = sld [smem:[#allocation0]]
  $region54: #{tpu_custom_call.1} parent=0
    _
  %s10 = ssub.s32 1, %s8
  %s11 = scalar_select 0, %s10, %s8
  $region1: #{tpu_custom_call.1} parent=0
    #allocation2 [shape = 'u8[4096]{0}', space=vmem, size = 0x1000, scoped, tag = 'input window, operand 0, single buffered']
    #allocation3 [shape = 's32[1]{0}', space=sflag, size = 0x4, scoped, tag = 'scoped memory for tpu_custom_call.1']
    #allocation4 [shape = 's32[1]{0}', space=sflag, size = 0x4, scoped, tag = 'scoped memory for tpu_custom_call.1']
    #allocation5 [shape = 'u8[8192]{0}', space=vmem, size = 0x2000, scoped, tag = 'input window, operand 1, single buffered']
    #allocation6 [shape = 's32[1]{0}', space=sflag, size = 0x4, scoped, tag = 'scoped memory for tpu_custom_call.1']
    #allocation7 [shape = 'u8[65536]{0}', space=vmem, size = 0x10000, scoped, tag = 'input window, operand 3, single buffered']
    #allocation8 [shape = 'u8[65536]{0}', space=vmem, size = 0x10000, scoped, tag = 'input window, operand 5, single buffered']
    #allocation9 [shape = 's32[1]{0}', space=sflag, size = 0x4, scoped, tag = 'scoped memory for tpu_custom_call.1']
    #allocation10 [shape = 'u8[4096]{0}', space=vmem, size = 0x1000, scoped, tag = 'output window, operand 0, single buffered']
    %12 = vsyncpa [#allocation3], 0
    %13 = vsyncpa [#allocation6], 0
    %14 = vsyncpa [#allocation9], 0
    %15 = vsyncpa [#allocation4], 0
    // Predicated region
    $region2: #{tpu_custom_call.1} parent=1 // pred_check
      _
    $region3: #{tpu_custom_call.1} parent=1 // pred_check_branch
      %17 = sbr.rel (0) target = $region5
    $region4: #{tpu_custom_call.1} parent=1 // pred_region
      %19 = vsyncadd [#allocation3], 0
      %s21 = sshll.u32 %s0, 4
      %s22 = int_to_ptr.hbm [resolvable:$true] %s21
      %s23 = sshll.u32 [#allocation2], 4
      %s24 = int_to_ptr.vmem [resolvable:$true] %s23
      %26 = dma.hbm_to_vmem [thread:$0]  %s22, 128, %s24, [#allocation3]
    $region5: #{tpu_custom_call.1} parent=1 // pred_fallthru
      _
    // Predicated region
    $region6: #{tpu_custom_call.1} parent=1 // pred_check
      _
    $region7: #{tpu_custom_call.1} parent=1 // pred_check_branch
      %28 = sbr.rel (0) target = $region9
    $region8: #{tpu_custom_call.1} parent=1 // pred_region
      %30 = vsyncadd [#allocation6], 0
      %s31 = sshll.u32 %s1, 4
      %s32 = int_to_ptr.hbm [resolvable:$true] %s31
      %s33 = sshll.u32 [#allocation5], 4
      %s34 = int_to_ptr.vmem [resolvable:$true] %s33
      %39 = dma.hbm_to_vmem [thread:$0]  %s32, 256, %s34, [#allocation6], 128, 128, 8
    $region9: #{tpu_custom_call.1} parent=1 // pred_fallthru
      _
    // Predicated region
    $region10: #{tpu_custom_call.1} parent=1 // pred_check
      _
    $region11: #{tpu_custom_call.1} parent=1 // pred_check_branch
      %41 = sbr.rel (0) target = $region13
    $region12: #{tpu_custom_call.1} parent=1 // pred_region
      _
    $region13: #{tpu_custom_call.1} parent=1 // pred_fallthru
      _
    // Predicated region
    $region14: #{tpu_custom_call.1} parent=1 // pred_check
      _
    $region15: #{tpu_custom_call.1} parent=1 // pred_check_branch
      %43 = sbr.rel (0) target = $region17
    $region16: #{tpu_custom_call.1} parent=1 // pred_region
      %45 = vsyncadd [#allocation6], 0
      %s46 = sshll.u32 %s3, 4
      %s47 = int_to_ptr.hbm [resolvable:$true] %s46
      %s48 = sshll.u32 [#allocation7], 4
      %s49 = int_to_ptr.vmem [resolvable:$true] %s48
      %54 = dma.hbm_to_vmem [thread:$0]  %s47, 2048, %s49, [#allocation6], 128, 128, 8
    $region17: #{tpu_custom_call.1} parent=1 // pred_fallthru
      _
    // Predicated region
    $region18: #{tpu_custom_call.1} parent=1 // pred_check
      _
    $region19: #{tpu_custom_call.1} parent=1 // pred_check_branch
      %56 = sbr.rel (0) target = $region21
    $region20: #{tpu_custom_call.1} parent=1 // pred_region
      _
    $region21: #{tpu_custom_call.1} parent=1 // pred_fallthru
      _
    // Predicated region
    $region22: #{tpu_custom_call.1} parent=1 // pred_check
      _
    $region23: #{tpu_custom_call.1} parent=1 // pred_check_branch
      %58 = sbr.rel (0) target = $region25
    $region24: #{tpu_custom_call.1} parent=1 // pred_region
      %60 = vsyncadd [#allocation9], 0
      %s61 = sshll.u32 %s5, 4
      %s62 = int_to_ptr.hbm [resolvable:$true] %s61
      %s63 = sshll.u32 [#allocation8], 4
      %s64 = int_to_ptr.vmem [resolvable:$true] %s63
      %69 = dma.hbm_to_vmem [thread:$0]  %s62, 2048, %s64, [#allocation9], 128, 128, 8
    $region25: #{tpu_custom_call.1} parent=1 // pred_fallthru
      _
    // Predicated region
    $region26: #{tpu_custom_call.1} parent=1 // pred_check
      _
    $region27: #{tpu_custom_call.1} parent=1 // pred_check_branch
      %71 = sbr.rel (0) target = $region29
    $region28: #{tpu_custom_call.1} parent=1 // pred_region
      _
    $region29: #{tpu_custom_call.1} parent=1 // pred_fallthru
      _
    // Predicated region
    $region30: #{tpu_custom_call.1} parent=1 // pred_check
      _
    $region31: #{tpu_custom_call.1} parent=1 // pred_check_branch
      %73 = sbr.rel (0) target = $region33
    $region32: #{tpu_custom_call.1} parent=1 // pred_region
      %75 = dma.done [#allocation3], 128
    $region33: #{tpu_custom_call.1} parent=1 // pred_fallthru
      _
    // Predicated region
    $region34: #{tpu_custom_call.1} parent=1 // pred_check
      _
    $region35: #{tpu_custom_call.1} parent=1 // pred_check_branch
      %77 = sbr.rel (0) target = $region37
    $region36: #{tpu_custom_call.1} parent=1 // pred_region
      %79 = dma.done [#allocation6], 256
    $region37: #{tpu_custom_call.1} parent=1 // pred_fallthru
      _
    // Predicated region
    $region38: #{tpu_custom_call.1} parent=1 // pred_check
      _
    $region39: #{tpu_custom_call.1} parent=1 // pred_check_branch
      %81 = sbr.rel (0) target = $region41
    $region40: #{tpu_custom_call.1} parent=1 // pred_region
      %83 = dma.done [#allocation6], 2048
    $region41: #{tpu_custom_call.1} parent=1 // pred_fallthru
      _
    // Predicated region
    $region42: #{tpu_custom_call.1} parent=1 // pred_check
      _
    $region43: #{tpu_custom_call.1} parent=1 // pred_check_branch
      %85 = sbr.rel (0) target = $region45
    $region44: #{tpu_custom_call.1} parent=1 // pred_region
      %87 = dma.done [#allocation9], 2048
    $region45: #{tpu_custom_call.1} parent=1 // pred_fallthru
      _
    %v88 = vld [vmem:[#allocation2] sm:$0xff]
    %v89 = vld [vmem:[#allocation5] sm:$0xff]
    %v90 = vld [vmem:[#allocation5 + $0x8] sm:$0xff]
    %v91 = vld [vmem:[%s2] sm:$0x1]
    %v93 = vperm.slane %v91, 0
    %vm95 = vcmask 130048
    %v97 = vsel %vm95, %v88, 0
    %99 = vmatpush.msra.mxu0 0.0
    %100 = vmatpush.msra.mxu0 0.0
    %101 = vmatpush.msra.mxu0 0.0
    %102 = vmatpush.msra.mxu0 0.0
    %103 = vmatpush.msra.mxu0 0.0
    %104 = vmatpush.msra.mxu0 0.0
    %105 = vmatpush.msra.mxu0 0.0
    %106 = vmatpush.msra.mxu0 0.0
    %107 = vmatpush.msra.mxu0 0.0
    %108 = vmatpush.msra.mxu0 0.0
    %109 = vmatpush.msra.mxu0 0.0
    %110 = vmatpush.msra.mxu0 0.0
    %111 = vmatpush.msra.mxu0 0.0
    %112 = vmatpush.msra.mxu0 0.0
    %113 = vmatpush.msra.mxu0 %v90
    %114 = vmatpush.msra.mxu0 %v89
    %115 = vmatmul.f32.gmra.mxu0 %v97
    %v116 = vpop.f32.mrf.mxu0
    %v117 = vadd.f32 %v93, %v116
    %118 = vdwg.mxu0
    %v119 = vsub.f32 0.0, %v117
    %v120 = vmul.f32 %v119, 1.442695
    %v121 = vpow.pop %v120
    %v122 = vadd.f32 %v121, 1.0
    %v123 = vrcp.pop %v122
    %v124 = vld [vmem:[#allocation7] sm:$0xff]
    %v125 = vld [vmem:[#allocation7 + $0x8] sm:$0xff]
    %v126 = vld [vmem:[#allocation7 + $0x10] sm:$0xff]
    %v127 = vld [vmem:[#allocation7 + $0x18] sm:$0xff]
    %v128 = vld [vmem:[#allocation7 + $0x20] sm:$0xff]
    %v129 = vld [vmem:[#allocation7 + $0x28] sm:$0xff]
    %v130 = vld [vmem:[#allocation7 + $0x30] sm:$0xff]
    %v131 = vld [vmem:[#allocation7 + $0x38] sm:$0xff]
    %v132 = vld [vmem:[#allocation7 + $0x40] sm:$0xff]
    %v133 = vld [vmem:[#allocation7 + $0x48] sm:$0xff]
    %v134 = vld [vmem:[#allocation7 + $0x50] sm:$0xff]
    %v135 = vld [vmem:[#allocation7 + $0x58] sm:$0xff]
    %v136 = vld [vmem:[#allocation7 + $0x60] sm:$0xff]
    %v137 = vld [vmem:[#allocation7 + $0x68] sm:$0xff]
    %v138 = vld [vmem:[#allocation7 + $0x70] sm:$0xff]
    %v139 = vld [vmem:[#allocation7 + $0x78] sm:$0xff]
    %v140 = vld [vmem:[%s4] sm:$0x1]
    %v142 = vperm.slane %v140, 0
    %144 = vmatpush.msra.mxu0 %v139
    %145 = vmatpush.msra.mxu0 %v138
    %146 = vmatpush.msra.mxu0 %v137
    %147 = vmatpush.msra.mxu0 %v136
    %148 = vmatpush.msra.mxu0 %v135
    %149 = vmatpush.msra.mxu0 %v134
    %150 = vmatpush.msra.mxu0 %v133
    %151 = vmatpush.msra.mxu0 %v132
    %152 = vmatpush.msra.mxu0 %v131
    %153 = vmatpush.msra.mxu0 %v130
    %154 = vmatpush.msra.mxu0 %v129
    %155 = vmatpush.msra.mxu0 %v128
    %156 = vmatpush.msra.mxu0 %v127
    %157 = vmatpush.msra.mxu0 %v126
    %158 = vmatpush.msra.mxu0 %v125
    %159 = vmatpush.msra.mxu0 %v124
    %160 = vmatmul.f32.gmra.mxu0 %v123
    %v161 = vpop.f32.mrf.mxu0
    %v162 = vadd.f32 %v142, %v161
    %163 = vdwg.mxu0
    %v164 = vsub.f32 0.0, %v162
    %v165 = vmul.f32 %v164, 1.442695
    %v166 = vpow.pop %v165
    %v167 = vadd.f32 %v166, 1.0
    %v168 = vrcp.pop %v167
    %v169 = vld [vmem:[#allocation8] sm:$0xff]
    %v170 = vld [vmem:[#allocation8 + $0x8] sm:$0xff]
    %v171 = vld [vmem:[#allocation8 + $0x10] sm:$0xff]
    %v172 = vld [vmem:[#allocation8 + $0x18] sm:$0xff]
    %v173 = vld [vmem:[#allocation8 + $0x20] sm:$0xff]
    %v174 = vld [vmem:[#allocation8 + $0x28] sm:$0xff]
    %v175 = vld [vmem:[#allocation8 + $0x30] sm:$0xff]
    %v176 = vld [vmem:[#allocation8 + $0x38] sm:$0xff]
    %v177 = vld [vmem:[#allocation8 + $0x40] sm:$0xff]
    %v178 = vld [vmem:[#allocation8 + $0x48] sm:$0xff]
    %v179 = vld [vmem:[#allocation8 + $0x50] sm:$0xff]
    %v180 = vld [vmem:[#allocation8 + $0x58] sm:$0xff]
    %v181 = vld [vmem:[#allocation8 + $0x60] sm:$0xff]
    %v182 = vld [vmem:[#allocation8 + $0x68] sm:$0xff]
    %v183 = vld [vmem:[#allocation8 + $0x70] sm:$0xff]
    %v184 = vld [vmem:[#allocation8 + $0x78] sm:$0xff]
    %v185 = vld [vmem:[%s6] sm:$0x1]
    %v187 = vperm.slane %v185, 0
    %189 = vmatpush.msra.mxu0 %v184
    %190 = vmatpush.msra.mxu0 %v183
    %191 = vmatpush.msra.mxu0 %v182
    %192 = vmatpush.msra.mxu0 %v181
    %193 = vmatpush.msra.mxu0 %v180
    %194 = vmatpush.msra.mxu0 %v179
    %195 = vmatpush.msra.mxu0 %v178
    %196 = vmatpush.msra.mxu0 %v177
    %197 = vmatpush.msra.mxu0 %v176
    %198 = vmatpush.msra.mxu0 %v175
    %199 = vmatpush.msra.mxu0 %v174
    %200 = vmatpush.msra.mxu0 %v173
    %201 = vmatpush.msra.mxu0 %v172
    %202 = vmatpush.msra.mxu0 %v171
    %203 = vmatpush.msra.mxu0 %v170
    %204 = vmatpush.msra.mxu0 %v169
    %205 = vmatmul.f32.gmra.mxu0 %v168
    %v206 = vpop.f32.mrf.mxu0
    %v207 = vadd.f32 %v187, %v206
    %208 = vdwg.mxu0
    %209 = vst [vmem:[#allocation10] sm:$0xff] %v207
    // Predicated region
    $region46: #{tpu_custom_call.1} parent=1 // pred_check
      _
    $region47: #{tpu_custom_call.1} parent=1 // pred_check_branch
      %211 = sbr.rel (0) target = $region49
    $region48: #{tpu_custom_call.1} parent=1 // pred_region
      %213 = vsyncadd [#allocation4], 0
      %s215 = sshll.u32 [#allocation10], 4
      %s216 = int_to_ptr.vmem [resolvable:$true] %s215
      %s217 = sshll.u32 %s7, 4
      %s218 = int_to_ptr.hbm [resolvable:$true] %s217
      %220 = dma.vmem_to_hbm [thread:$0]  %s216, 128, %s218, [#allocation4]
    $region49: #{tpu_custom_call.1} parent=1 // pred_fallthru
      _
    // Predicated region
    $region50: #{tpu_custom_call.1} parent=1 // pred_check
      _
    $region51: #{tpu_custom_call.1} parent=1 // pred_check_branch
      %222 = sbr.rel (0) target = $region53
    $region52: #{tpu_custom_call.1} parent=1 // pred_region
      %224 = dma.done [#allocation4], 128
    $region53: #{tpu_custom_call.1} parent=1 // pred_fallthru
      _
    %225 = vsyncpa [#allocation3], 1
    %226 = vsyncpa [#allocation6], 1
    %227 = vsyncpa [#allocation9], 1
    %228 = vsyncpa [#allocation4], 1

// kernel: tpu_custom_call.1
$region0: #{tpu_custom_call.1}
  #allocation0 [shape = 'u32[]', space=smem, size = 0x4, offset = 0x4, fixed_abs, tag = 'smem constant byte address 0x4 - core index']
  #allocation1 [shape = 'u32[72,128]{1,0:T(1,128)}', space=vmem, size = 0x9000, scoped, tag = 'internal scratch']
  %s0 = inlined_call_operand.hbm [shape: f32[8,16], index: 0, kind: input, shape index: {}]
  %s1 = inlined_call_operand.hbm [shape: f32[16,128], index: 1, kind: input, shape index: {}]
  %s2 = inlined_call_operand.vmem [shape: f32[1,128], index: 2, kind: input, shape index: {}]
  %s3 = inlined_call_operand.hbm [shape: f32[128,128], index: 3, kind: input, shape index: {}]
  %s4 = inlined_call_operand.vmem [shape: f32[1,128], index: 4, kind: input, shape index: {}]
  %s5 = inlined_call_operand.hbm [shape: f32[128,128], index: 5, kind: input, shape index: {}]
  %s6 = inlined_call_operand.vmem [shape: f32[1,128], index: 6, kind: input, shape index: {}]
  %s7 = inlined_call_operand.hbm [shape: f32[8,128], index: 7, kind: output, shape index: {}]
  %s8 = sld [smem:[#allocation0]]
  $region54: #{tpu_custom_call.1} parent=0
    _
  %s10 = ssub.s32 1, %s8
  %s11 = scalar_select 0, %s10, %s8
  $region1: #{tpu_custom_call.1} parent=0
    #allocation2 [shape = 'u8[4096]{0}', space=vmem, size = 0x1000, scoped, tag = 'input window, operand 0, single buffered']
    #allocation3 [shape = 's32[1]{0}', space=sflag, size = 0x4, scoped, tag = 'scoped memory for tpu_custom_call.1']
    #allocation4 [shape = 's32[1]{0}', space=sflag, size = 0x4, scoped, tag = 'scoped memory for tpu_custom_call.1']
    #allocation5 [shape = 'u8[8192]{0}', space=vmem, size = 0x2000, scoped, tag = 'input window, operand 1, single buffered']
    #allocation6 [shape = 's32[1]{0}', space=sflag, size = 0x4, scoped, tag = 'scoped memory for tpu_custom_call.1']
    #allocation7 [shape = 'u8[65536]{0}', space=vmem, size = 0x10000, scoped, tag = 'input window, operand 3, single buffered']
    #allocation8 [shape = 'u8[65536]{0}', space=vmem, size = 0x10000, scoped, tag = 'input window, operand 5, single buffered']
    #allocation9 [shape = 's32[1]{0}', space=sflag, size = 0x4, scoped, tag = 'scoped memory for tpu_custom_call.1']
    #allocation10 [shape = 'u8[4096]{0}', space=vmem, size = 0x1000, scoped, tag = 'output window, operand 0, single buffered']
    %12 = vsyncpa [#allocation3], 0
    %13 = vsyncpa [#allocation6], 0
    %14 = vsyncpa [#allocation9], 0
    %15 = vsyncpa [#allocation4], 0
    // Predicated region
    $region2: #{tpu_custom_call.1} parent=1 // pred_check
      _
    $region3: #{tpu_custom_call.1} parent=1 // pred_check_branch
      %17 = sbr.rel (0) target = $region5
    $region4: #{tpu_custom_call.1} parent=1 // pred_region
      %19 = vsyncadd [#allocation3], 0
      %s21 = sshll.u32 %s0, 4
      %s22 = int_to_ptr.hbm [resolvable:$true] %s21
      %s23 = sshll.u32 [#allocation2], 4
      %s24 = int_to_ptr.vmem [resolvable:$true] %s23
      %26 = dma.hbm_to_vmem [thread:$0]  %s22, 128, %s24, [#allocation3]
    $region5: #{tpu_custom_call.1} parent=1 // pred_fallthru
      _
    // Predicated region
    $region6: #{tpu_custom_call.1} parent=1 // pred_check
      _
    $region7: #{tpu_custom_call.1} parent=1 // pred_check_branch
      %28 = sbr.rel (0) target = $region9
    $region8: #{tpu_custom_call.1} parent=1 // pred_region
      %30 = vsyncadd [#allocation6], 0
      %s31 = sshll.u32 %s1, 4
      %s32 = int_to_ptr.hbm [resolvable:$true] %s31
      %s33 = sshll.u32 [#allocation5], 4
      %s34 = int_to_ptr.vmem [resolvable:$true] %s33
      %39 = dma.hbm_to_vmem [thread:$0]  %s32, 256, %s34, [#allocation6], 128, 128, 8
    $region9: #{tpu_custom_call.1} parent=1 // pred_fallthru
      _
    // Predicated region
    $region10: #{tpu_custom_call.1} parent=1 // pred_check
      _
    $region11: #{tpu_custom_call.1} parent=1 // pred_check_branch
      %41 = sbr.rel (0) target = $region13
    $region12: #{tpu_custom_call.1} parent=1 // pred_region
      _
    $region13: #{tpu_custom_call.1} parent=1 // pred_fallthru
      _
    // Predicated region
    $region14: #{tpu_custom_call.1} parent=1 // pred_check
      _
    $region15: #{tpu_custom_call.1} parent=1 // pred_check_branch
      %43 = sbr.rel (0) target = $region17
    $region16: #{tpu_custom_call.1} parent=1 // pred_region
      %45 = vsyncadd [#allocation6], 0
      %s46 = sshll.u32 %s3, 4
      %s47 = int_to_ptr.hbm [resolvable:$true] %s46
      %s48 = sshll.u32 [#allocation7], 4
      %s49 = int_to_ptr.vmem [resolvable:$true] %s48
      %54 = dma.hbm_to_vmem [thread:$0]  %s47, 2048, %s49, [#allocation6], 128, 128, 8
    $region17: #{tpu_custom_call.1} parent=1 // pred_fallthru
      _
    // Predicated region
    $region18: #{tpu_custom_call.1} parent=1 // pred_check
      _
    $region19: #{tpu_custom_call.1} parent=1 // pred_check_branch
      %56 = sbr.rel (0) target = $region21
    $region20: #{tpu_custom_call.1} parent=1 // pred_region
      _
    $region21: #{tpu_custom_call.1} parent=1 // pred_fallthru
      _
    // Predicated region
    $region22: #{tpu_custom_call.1} parent=1 // pred_check
      _
    $region23: #{tpu_custom_call.1} parent=1 // pred_check_branch
      %58 = sbr.rel (0) target = $region25
    $region24: #{tpu_custom_call.1} parent=1 // pred_region
      %60 = vsyncadd [#allocation9], 0
      %s61 = sshll.u32 %s5, 4
      %s62 = int_to_ptr.hbm [resolvable:$true] %s61
      %s63 = sshll.u32 [#allocation8], 4
      %s64 = int_to_ptr.vmem [resolvable:$true] %s63
      %69 = dma.hbm_to_vmem [thread:$0]  %s62, 2048, %s64, [#allocation9], 128, 128, 8
    $region25: #{tpu_custom_call.1} parent=1 // pred_fallthru
      _
    // Predicated region
    $region26: #{tpu_custom_call.1} parent=1 // pred_check
      _
    $region27: #{tpu_custom_call.1} parent=1 // pred_check_branch
      %71 = sbr.rel (0) target = $region29
    $region28: #{tpu_custom_call.1} parent=1 // pred_region
      _
    $region29: #{tpu_custom_call.1} parent=1 // pred_fallthru
      _
    // Predicated region
    $region30: #{tpu_custom_call.1} parent=1 // pred_check
      _
    $region31: #{tpu_custom_call.1} parent=1 // pred_check_branch
      %73 = sbr.rel (0) target = $region33
    $region32: #{tpu_custom_call.1} parent=1 // pred_region
      %75 = dma.done [#allocation3], 128
    $region33: #{tpu_custom_call.1} parent=1 // pred_fallthru
      _
    // Predicated region
    $region34: #{tpu_custom_call.1} parent=1 // pred_check
      _
    $region35: #{tpu_custom_call.1} parent=1 // pred_check_branch
      %77 = sbr.rel (0) target = $region37
    $region36: #{tpu_custom_call.1} parent=1 // pred_region
      %79 = dma.done [#allocation6], 256
    $region37: #{tpu_custom_call.1} parent=1 // pred_fallthru
      _
    // Predicated region
    $region38: #{tpu_custom_call.1} parent=1 // pred_check
      _
    $region39: #{tpu_custom_call.1} parent=1 // pred_check_branch
      %81 = sbr.rel (0) target = $region41
    $region40: #{tpu_custom_call.1} parent=1 // pred_region
      %83 = dma.done [#allocation6], 2048
    $region41: #{tpu_custom_call.1} parent=1 // pred_fallthru
      _
    // Predicated region
    $region42: #{tpu_custom_call.1} parent=1 // pred_check
      _
    $region43: #{tpu_custom_call.1} parent=1 // pred_check_branch
      %85 = sbr.rel (0) target = $region45
    $region44: #{tpu_custom_call.1} parent=1 // pred_region
      %87 = dma.done [#allocation9], 2048
    $region45: #{tpu_custom_call.1} parent=1 // pred_fallthru
      _
    %v88 = vld [vmem:[#allocation2] sm:$0xff]
    %v89 = vld [vmem:[#allocation5] sm:$0xff]
    %v90 = vld [vmem:[#allocation5 + $0x8] sm:$0xff]
    %v91 = vld [vmem:[%s2] sm:$0x1]
    %v93 = vperm.slane %v91, 0
    %vm95 = vcmask 130048
    %v97 = vsel %vm95, %v88, 0
    %99 = vmatpush.msra.mxu0 0.0
    %100 = vmatpush.msra.mxu0 0.0
    %101 = vmatpush.msra.mxu0 0.0
    %102 = vmatpush.msra.mxu0 0.0
    %103 = vmatpush.msra.mxu0 0.0
    %104 = vmatpush.msra.mxu0 0.0
    %105 = vmatpush.msra.mxu0 0.0
    %106 = vmatpush.msra.mxu0 0.0
    %107 = vmatpush.msra.mxu0 0.0
    %108 = vmatpush.msra.mxu0 0.0
    %109 = vmatpush.msra.mxu0 0.0
    %110 = vmatpush.msra.mxu0 0.0
    %111 = vmatpush.msra.mxu0 0.0
    %112 = vmatpush.msra.mxu0 0.0
    %113 = vmatpush.msra.mxu0 %v90
    %114 = vmatpush.msra.mxu0 %v89
    %115 = vmatmul.f32.gmra.mxu0 %v97
    %v116 = vpop.f32.mrf.mxu0
    %v117 = vadd.f32 %v93, %v116
    %118 = vdwg.mxu0
    %v119 = vsub.f32 0.0, %v117
    %v120 = vmul.f32 %v119, 1.442695
    %v121 = vpow.pop %v120
    %v122 = vadd.f32 %v121, 1.0
    %v123 = vrcp.pop %v122
    %v124 = vld [vmem:[#allocation7] sm:$0xff]
    %v125 = vld [vmem:[#allocation7 + $0x8] sm:$0xff]
    %v126 = vld [vmem:[#allocation7 + $0x10] sm:$0xff]
    %v127 = vld [vmem:[#allocation7 + $0x18] sm:$0xff]
    %v128 = vld [vmem:[#allocation7 + $0x20] sm:$0xff]
    %v129 = vld [vmem:[#allocation7 + $0x28] sm:$0xff]
    %v130 = vld [vmem:[#allocation7 + $0x30] sm:$0xff]
    %v131 = vld [vmem:[#allocation7 + $0x38] sm:$0xff]
    %v132 = vld [vmem:[#allocation7 + $0x40] sm:$0xff]
    %v133 = vld [vmem:[#allocation7 + $0x48] sm:$0xff]
    %v134 = vld [vmem:[#allocation7 + $0x50] sm:$0xff]
    %v135 = vld [vmem:[#allocation7 + $0x58] sm:$0xff]
    %v136 = vld [vmem:[#allocation7 + $0x60] sm:$0xff]
    %v137 = vld [vmem:[#allocation7 + $0x68] sm:$0xff]
    %v138 = vld [vmem:[#allocation7 + $0x70] sm:$0xff]
    %v139 = vld [vmem:[#allocation7 + $0x78] sm:$0xff]
    %v140 = vld [vmem:[%s4] sm:$0x1]
    %v142 = vperm.slane %v140, 0
    %144 = vmatpush.msra.mxu0 %v139
    %145 = vmatpush.msra.mxu0 %v138
    %146 = vmatpush.msra.mxu0 %v137
    %147 = vmatpush.msra.mxu0 %v136
    %148 = vmatpush.msra.mxu0 %v135
    %149 = vmatpush.msra.mxu0 %v134
    %150 = vmatpush.msra.mxu0 %v133
    %151 = vmatpush.msra.mxu0 %v132
    %152 = vmatpush.msra.mxu0 %v131
    %153 = vmatpush.msra.mxu0 %v130
    %154 = vmatpush.msra.mxu0 %v129
    %155 = vmatpush.msra.mxu0 %v128
    %156 = vmatpush.msra.mxu0 %v127
    %157 = vmatpush.msra.mxu0 %v126
    %158 = vmatpush.msra.mxu0 %v125
    %159 = vmatpush.msra.mxu0 %v124
    %160 = vmatmul.f32.gmra.mxu0 %v123
    %v161 = vpop.f32.mrf.mxu0
    %v162 = vadd.f32 %v142, %v161
    %163 = vdwg.mxu0
    %v164 = vsub.f32 0.0, %v162
    %v165 = vmul.f32 %v164, 1.442695
    %v166 = vpow.pop %v165
    %v167 = vadd.f32 %v166, 1.0
    %v168 = vrcp.pop %v167
    %v169 = vld [vmem:[#allocation8] sm:$0xff]
    %v170 = vld [vmem:[#allocation8 + $0x8] sm:$0xff]
    %v171 = vld [vmem:[#allocation8 + $0x10] sm:$0xff]
    %v172 = vld [vmem:[#allocation8 + $0x18] sm:$0xff]
    %v173 = vld [vmem:[#allocation8 + $0x20] sm:$0xff]
    %v174 = vld [vmem:[#allocation8 + $0x28] sm:$0xff]
    %v175 = vld [vmem:[#allocation8 + $0x30] sm:$0xff]
    %v176 = vld [vmem:[#allocation8 + $0x38] sm:$0xff]
    %v177 = vld [vmem:[#allocation8 + $0x40] sm:$0xff]
    %v178 = vld [vmem:[#allocation8 + $0x48] sm:$0xff]
    %v179 = vld [vmem:[#allocation8 + $0x50] sm:$0xff]
    %v180 = vld [vmem:[#allocation8 + $0x58] sm:$0xff]
    %v181 = vld [vmem:[#allocation8 + $0x60] sm:$0xff]
    %v182 = vld [vmem:[#allocation8 + $0x68] sm:$0xff]
    %v183 = vld [vmem:[#allocation8 + $0x70] sm:$0xff]
    %v184 = vld [vmem:[#allocation8 + $0x78] sm:$0xff]
    %v185 = vld [vmem:[%s6] sm:$0x1]
    %v187 = vperm.slane %v185, 0
    %189 = vmatpush.msra.mxu0 %v184
    %190 = vmatpush.msra.mxu0 %v183
    %191 = vmatpush.msra.mxu0 %v182
    %192 = vmatpush.msra.mxu0 %v181
    %193 = vmatpush.msra.mxu0 %v180
    %194 = vmatpush.msra.mxu0 %v179
    %195 = vmatpush.msra.mxu0 %v178
    %196 = vmatpush.msra.mxu0 %v177
    %197 = vmatpush.msra.mxu0 %v176
    %198 = vmatpush.msra.mxu0 %v175
    %199 = vmatpush.msra.mxu0 %v174
    %200 = vmatpush.msra.mxu0 %v173
    %201 = vmatpush.msra.mxu0 %v172
    %202 = vmatpush.msra.mxu0 %v171
    %203 = vmatpush.msra.mxu0 %v170
    %204 = vmatpush.msra.mxu0 %v169
    %205 = vmatmul.f32.gmra.mxu0 %v168
    %v206 = vpop.f32.mrf.mxu0
    %v207 = vadd.f32 %v187, %v206
    %208 = vdwg.mxu0
    %209 = vst [vmem:[#allocation10] sm:$0xff] %v207
    // Predicated region
    $region46: #{tpu_custom_call.1} parent=1 // pred_check
      _
    $region47: #{tpu_custom_call.1} parent=1 // pred_check_branch
      %211 = sbr.rel (0) target = $region49
    $region48: #{tpu_custom_call.1} parent=1 // pred_region
      %213 = vsyncadd [#allocation4], 0
      %s215 = sshll.u32 [#allocation10], 4
      %s216 = int_to_ptr.vmem [resolvable:$true] %s215
      %s217 = sshll.u32 %s7, 4
      %s218 = int_to_ptr.hbm [resolvable:$true] %s217
      %220 = dma.vmem_to_hbm [thread:$0]  %s216, 128, %s218, [#allocation4]
    $region49: #{tpu_custom_call.1} parent=1 // pred_fallthru
      _
    // Predicated region
    $region50: #{tpu_custom_call.1} parent=1 // pred_check
      _
    $region51: #{tpu_custom_call.1} parent=1 // pred_check_branch
      %222 = sbr.rel (0) target = $region53
    $region52: #{tpu_custom_call.1} parent=1 // pred_region
      %224 = dma.done [#allocation4], 128
    $region53: #{tpu_custom_call.1} parent=1 // pred_fallthru
      _
    %225 = vsyncpa [#allocation3], 1
    %226 = vsyncpa [#allocation6], 1
    %227 = vsyncpa [#allocation9], 1
    %228 = vsyncpa [#allocation4], 1

</llo_original>
